<compile_context>
chip_gen: v7x
topology: tpu7x:2x2x1
jax: 0.10.0
libtpu: 0.0.40
codegen_flags: <defaults>
</compile_context>

<pallas_src>
import functools

import jax
import jax.numpy as jnp
from jax.experimental import pallas as pl
from jax.experimental.pallas import tpu as pltpu

LANE = 128
BF16_SUBLANE = 16          # native bf16 vreg tile is (16, 128)


def _round_up(n, m):
    return ((n + m - 1) // m) * m


def actor_kernel(alphas_ref, x_ref, w1_ref, b1_ref, w2_ref, b2_ref,
                 w3_ref, b3_ref, bounds_ref, out_ref):
    x = x_ref[...]                                               # (TB, F) bf16
    a1 = alphas_ref[0]                                           # scalar f32 (SMEM)
    a2 = alphas_ref[1]

    # Layer 1: Linear (bf16 x bf16 -> f32 acc) + PReLU (f32 on the VPU)
    h1 = jnp.dot(x, w1_ref[...], preferred_element_type=jnp.float32)
    h1 = h1 + b1_ref[...]
    h1 = jnp.where(h1 > 0, h1, a1 * h1)                          # (TB, H) f32

    # Layer 2: Linear + PReLU
    h2 = jnp.dot(h1.astype(jnp.bfloat16), w2_ref[...],
                 preferred_element_type=jnp.float32)
    h2 = h2 + b2_ref[...]
    h2 = jnp.where(h2 > 0, h2, a2 * h2)                          # (TB, H) f32

    # Layer 3: Linear + Tanh, scale by (lane-padded) action bounds.
    y = jnp.dot(h2.astype(jnp.bfloat16), w3_ref[...],
                preferred_element_type=jnp.float32)
    y = jnp.tanh(y + b3_ref[...]) * bounds_ref[...]              # (TB, A_pad) f32
    out_ref[...] = y.astype(out_ref.dtype)                       # bf16 lane-dense store


def prepare_actor(params, action_bounds):
    """One-time prep: bf16 weight casts + lane padding, done OUTSIDE the
    per-call forward so each call doesn't redo O(H^2) cast/pad work."""
    H = params["w1"].shape[1]
    A = int(action_bounds.shape[-1])
    A_pad = _round_up(max(A, 1), LANE)
    return {
        "w1": params["w1"].astype(jnp.bfloat16),
        "b1": params["b1"].reshape(1, H).astype(jnp.float32),
        "w2": params["w2"].astype(jnp.bfloat16),
        "b2": params["b2"].reshape(1, H).astype(jnp.float32),
        "w3": jnp.zeros((H, A_pad), jnp.bfloat16).at[:, :A].set(
            params["w3"].astype(jnp.bfloat16)),
        "b3": jnp.zeros((1, A_pad), jnp.float32).at[:, :A].set(
            params["b3"].reshape(1, A).astype(jnp.float32)),
        "bounds": jnp.zeros((1, A_pad), jnp.float32).at[:, :A].set(
            action_bounds.reshape(1, A).astype(jnp.float32)),
        "alphas": jnp.stack([params["a1"].reshape(()),
                             params["a2"].reshape(())]).astype(jnp.float32),
    }


@functools.partial(jax.jit, static_argnames=("n_actions", "block_b"))
def actor_forward(x, prep, n_actions, block_b=None):
    """x: (B, F) float32.  prep: output of prepare_actor().  Returns (B, A) f32."""
    B, F = x.shape
    H = prep["w1"].shape[1]
    A_pad = prep["w3"].shape[1]
    A = n_actions

    # Batch tile choice (perf items 1, 2, 5):
    #   * multiple of 16 (bf16 sublane tile),
    #   * as large as reasonable (overhead-bound kernel -> few grid steps),
    #   * but >= 2 grid steps whenever B > 16 so the "parallel" axis can
    #     shard across v7x's two TensorCores.
    if block_b is None:
        if B <= 16:
            block_b = 16
        else:
            block_b = min(2048, _round_up((B + 1) // 2, BF16_SUBLANE))
    block_b = max(BF16_SUBLANE, _round_up(block_b, BF16_SUBLANE))
    B_pad = _round_up(B, block_b)
    grid_b = B_pad // block_b

    # Only the activations are touched per call: cast to bf16 and pad batch.
    x_bf16 = x.astype(jnp.bfloat16)
    if B_pad == B:
        x_p = x_bf16
    else:
        x_p = jnp.zeros((B_pad, F), jnp.bfloat16).at[:B, :].set(x_bf16)

    # Weights/biases: constant block index -> stay resident in VMEM.
    def resident(shape):
        return pl.BlockSpec(shape, lambda i: (0, 0))

    out = pl.pallas_call(
        actor_kernel,
        out_shape=jax.ShapeDtypeStruct((B_pad, A_pad), jnp.bfloat16),
        grid_spec=pltpu.PrefetchScalarGridSpec(
            num_scalar_prefetch=0,
            grid=(grid_b,),
            in_specs=[
                pl.BlockSpec(memory_space=pltpu.MemorySpace.SMEM),   # alphas (2,)
                pl.BlockSpec((block_b, F), lambda i: (i, 0)),        # x tile
                resident((F, H)),                                    # w1
                resident((1, H)),                                    # b1
                resident((H, H)),                                    # w2
                resident((1, H)),                                    # b2
                resident((H, A_pad)),                                # w3 (padded)
                resident((1, A_pad)),                                # b3 (padded)
                resident((1, A_pad)),                                # bounds (padded)
            ],
            out_specs=pl.BlockSpec((block_b, A_pad), lambda i: (i, 0)),
        ),
        compiler_params=pltpu.CompilerParams(
            # Megacore sharding on v7x; harmless on single-TC v5e/v6e.
            # No vmem_limit_bytes: default scoped limits are ample here and
            # 64 MiB would have claimed all of v7x's physical VMEM.
            dimension_semantics=("parallel",),
        ),
    )(prep["alphas"], x_p, prep["w1"], prep["b1"], prep["w2"], prep["b2"],
      prep["w3"], prep["b3"], prep["bounds"])

    return out[:B, :A].astype(jnp.float32)


def init_params(key, n_features, n_actions):
    H = n_features * 8
    ks = jax.random.split(key, 6)
    scale1 = 1.0 / jnp.sqrt(n_features)
    scale2 = 1.0 / jnp.sqrt(H)
    return {
        "w1": jax.random.uniform(ks[0], (n_features, H), jnp.float32, -scale1, scale1),
        "b1": jax.random.uniform(ks[1], (1, H), jnp.float32, -scale1, scale1),
        "a1": jnp.full((1, 1), 0.25, jnp.float32),   # PReLU default init
        "w2": jax.random.uniform(ks[2], (H, H), jnp.float32, -scale2, scale2),
        "b2": jax.random.uniform(ks[3], (1, H), jnp.float32, -scale2, scale2),
        "a2": jnp.full((1, 1), 0.25, jnp.float32),
        "w3": jax.random.uniform(ks[4], (H, n_actions), jnp.float32, -scale2, scale2),
        "b3": jax.random.uniform(ks[5], (1, n_actions), jnp.float32, -scale2, scale2),
    }


def actor_reference(x, params, action_bounds):
    """Pure-JAX reference mirroring the kernel's bf16-input / f32-acc matmuls."""
    def bfr(v):   # bf16 rounding, math stays f32
        return v.astype(jnp.bfloat16).astype(jnp.float32)

    def prelu(v, a):
        return jnp.where(v > 0, v, a * v)

    h1 = prelu(bfr(x) @ bfr(params["w1"]) + params["b1"].reshape(1, -1),
               params["a1"].reshape(()))
    h2 = prelu(bfr(h1) @ bfr(params["w2"]) + params["b2"].reshape(1, -1),
               params["a2"].reshape(()))
    y = jnp.tanh(bfr(h2) @ bfr(params["w3"]) + params["b3"].reshape(1, -1))
    return y * action_bounds.reshape(1, -1)


if __name__ == "__main__":
    n_features = 16                 # hidden = 8 * 16 = 128 (lane-aligned)
    action_bounds = jnp.array([2.0, 1.0], dtype=jnp.float32)
    n_actions = int(action_bounds.shape[0])

    key = jax.random.PRNGKey(0)
    kx, kp, kx2, kx3 = jax.random.split(key, 4)
    params = init_params(kp, n_features, n_actions)
    prep = prepare_actor(params, action_bounds)

    # Tolerance covers bf16 input/weight rounding + bf16 output store.
    ATOL = RTOL = 2e-2

    # Case 1: B=128 -> default block_b=64, grid=(2,) (two parallel batch tiles).
    x = jax.random.normal(kx, (128, n_features), dtype=jnp.float32)
    out = jax.block_until_ready(actor_forward(x, prep, n_actions))
    ref = actor_reference(x, params, action_bounds)
    assert out.shape == (128, n_actions)
    assert jnp.allclose(out, ref, atol=ATOL, rtol=RTOL), "mismatch (even batch)"

    # Case 2: ragged tiny batch B=13 -> block_b=16, grid=(1,); pad + slice path.
    x2 = jax.random.normal(kx2, (13, n_features), dtype=jnp.float32)
    out2 = jax.block_until_ready(actor_forward(x2, prep, n_actions))
    ref2 = actor_reference(x2, params, action_bounds)
    assert out2.shape == (13, n_actions)
    assert jnp.allclose(out2, ref2, atol=ATOL, rtol=RTOL), "mismatch (ragged batch)"

    # Case 3: large batch B=2048 -> block_b=1024, grid=(2,); big-tile path.
    x3 = jax.random.normal(kx3, (2048, n_features), dtype=jnp.float32)
    out3 = jax.block_until_ready(actor_forward(x3, prep, n_actions))
    ref3 = actor_reference(x3, params, action_bounds)
    assert out3.shape == (2048, n_actions)
    assert jnp.allclose(out3, ref3, atol=ATOL, rtol=RTOL), "mismatch (large batch)"

    print("KERNEL_OK")
</pallas_src>

<mosaic_0001>
module attributes {stable_mosaic.version = 11 : i64} {
  func.func @actor_kernel(%arg0: i32, %arg1: memref<2xf32, #tpu.memory_space<smem>>, %arg2: memref<64x16xbf16, #tpu.memory_space<vmem>>, %arg3: memref<16x128xbf16, #tpu.memory_space<vmem>>, %arg4: memref<1x128xf32, #tpu.memory_space<vmem>>, %arg5: memref<128x128xbf16, #tpu.memory_space<vmem>>, %arg6: memref<1x128xf32, #tpu.memory_space<vmem>>, %arg7: memref<128x128xbf16, #tpu.memory_space<vmem>>, %arg8: memref<1x128xf32, #tpu.memory_space<vmem>>, %arg9: memref<1x128xf32, #tpu.memory_space<vmem>>, %arg10: memref<64x128xbf16, #tpu.memory_space<vmem>>) attributes {dimension_semantics = [#tpu.dimension_semantics<parallel>], iteration_bounds = array<i64: 2>, scalar_prefetch = 0 : i64, scratch_operands = 0 : i64, tpu.core_type = #tpu.core_type<tc>, window_params = [{transform_indices = @transform_0, window_bounds = array<i64: 2>}, {transform_indices = @transform_1, window_bounds = array<i64: 64, 16>}, {pipeline_mode = #tpu.pipeline_mode<synchronous>, transform_indices = @transform_2, window_bounds = array<i64: 16, 128>}, {pipeline_mode = #tpu.pipeline_mode<synchronous>, transform_indices = @transform_3, window_bounds = array<i64: 1, 128>}, {pipeline_mode = #tpu.pipeline_mode<synchronous>, transform_indices = @transform_4, window_bounds = array<i64: 128, 128>}, {pipeline_mode = #tpu.pipeline_mode<synchronous>, transform_indices = @transform_5, window_bounds = array<i64: 1, 128>}, {pipeline_mode = #tpu.pipeline_mode<synchronous>, transform_indices = @transform_6, window_bounds = array<i64: 128, 128>}, {pipeline_mode = #tpu.pipeline_mode<synchronous>, transform_indices = @transform_7, window_bounds = array<i64: 1, 128>}, {pipeline_mode = #tpu.pipeline_mode<synchronous>, transform_indices = @transform_8, window_bounds = array<i64: 1, 128>}, {transform_indices = @transform_9, window_bounds = array<i64: 64, 128>}]} {
    %c0 = arith.constant 0 : index
    %c0_0 = arith.constant 0 : index
    %0 = vector.load %arg2[%c0, %c0_0] : memref<64x16xbf16, #tpu.memory_space<vmem>>, vector<64x16xbf16>
    %c0_1 = arith.constant 0 : index
    %1 = memref.load %arg1[%c0_1] : memref<2xf32, #tpu.memory_space<smem>>
    %c1 = arith.constant 1 : index
    %2 = memref.load %arg1[%c1] : memref<2xf32, #tpu.memory_space<smem>>
    %c0_2 = arith.constant 0 : index
    %c0_3 = arith.constant 0 : index
    %3 = vector.load %arg3[%c0_2, %c0_3] : memref<16x128xbf16, #tpu.memory_space<vmem>>, vector<16x128xbf16>
    %cst = arith.constant dense<0.000000e+00> : vector<64x128xf32>
    %4 = tpu.matmul %0, %3, %cst {dimension_numbers = #tpu.dot_dimension_numbers<[1], [0], [0], [1], [0, 0, 1, 1], [], []>} : vector<64x16xbf16>, vector<16x128xbf16>, vector<64x128xf32> -> vector<64x128xf32>
    %c0_4 = arith.constant 0 : index
    %c0_5 = arith.constant 0 : index
    %5 = vector.load %arg4[%c0_4, %c0_5] : memref<1x128xf32, #tpu.memory_space<vmem>>, vector<1x128xf32>
    %6 = vector.broadcast %5 : vector<1x128xf32> to vector<64x128xf32>
    %7 = arith.addf %4, %6 : vector<64x128xf32>
    %cst_6 = arith.constant 0.000000e+00 : f32
    %8 = vector.broadcast %cst_6 : f32 to vector<64x128xf32>
    %9 = arith.cmpf ogt, %7, %8 : vector<64x128xf32>
    %10 = vector.broadcast %1 : f32 to vector<64x128xf32>
    %11 = arith.mulf %10, %7 : vector<64x128xf32>
    %12 = arith.select %9, %7, %11 : vector<64x128xi1>, vector<64x128xf32>
    %13 = arith.truncf %12 : vector<64x128xf32> to vector<64x128xbf16>
    %c0_7 = arith.constant 0 : index
    %c0_8 = arith.constant 0 : index
    %14 = vector.load %arg5[%c0_7, %c0_8] : memref<128x128xbf16, #tpu.memory_space<vmem>>, vector<128x128xbf16>
    %cst_9 = arith.constant dense<0.000000e+00> : vector<64x128xf32>
    %15 = tpu.matmul %13, %14, %cst_9 {dimension_numbers = #tpu.dot_dimension_numbers<[1], [0], [0], [1], [0, 0, 1, 1], [], []>} : vector<64x128xbf16>, vector<128x128xbf16>, vector<64x128xf32> -> vector<64x128xf32>
    %c0_10 = arith.constant 0 : index
    %c0_11 = arith.constant 0 : index
    %16 = vector.load %arg6[%c0_10, %c0_11] : memref<1x128xf32, #tpu.memory_space<vmem>>, vector<1x128xf32>
    %17 = vector.broadcast %16 : vector<1x128xf32> to vector<64x128xf32>
    %18 = arith.addf %15, %17 : vector<64x128xf32>
    %cst_12 = arith.constant 0.000000e+00 : f32
    %19 = vector.broadcast %cst_12 : f32 to vector<64x128xf32>
    %20 = arith.cmpf ogt, %18, %19 : vector<64x128xf32>
    %21 = vector.broadcast %2 : f32 to vector<64x128xf32>
    %22 = arith.mulf %21, %18 : vector<64x128xf32>
    %23 = arith.select %20, %18, %22 : vector<64x128xi1>, vector<64x128xf32>
    %24 = arith.truncf %23 : vector<64x128xf32> to vector<64x128xbf16>
    %c0_13 = arith.constant 0 : index
    %c0_14 = arith.constant 0 : index
    %25 = vector.load %arg7[%c0_13, %c0_14] : memref<128x128xbf16, #tpu.memory_space<vmem>>, vector<128x128xbf16>
    %cst_15 = arith.constant dense<0.000000e+00> : vector<64x128xf32>
    %26 = tpu.matmul %24, %25, %cst_15 {dimension_numbers = #tpu.dot_dimension_numbers<[1], [0], [0], [1], [0, 0, 1, 1], [], []>} : vector<64x128xbf16>, vector<128x128xbf16>, vector<64x128xf32> -> vector<64x128xf32>
    %c0_16 = arith.constant 0 : index
    %c0_17 = arith.constant 0 : index
    %27 = vector.load %arg8[%c0_16, %c0_17] : memref<1x128xf32, #tpu.memory_space<vmem>>, vector<1x128xf32>
    %28 = vector.broadcast %27 : vector<1x128xf32> to vector<64x128xf32>
    %29 = arith.addf %26, %28 : vector<64x128xf32>
    %30 = math.tanh %29 : vector<64x128xf32>
    %c0_18 = arith.constant 0 : index
    %c0_19 = arith.constant 0 : index
    %31 = vector.load %arg9[%c0_18, %c0_19] : memref<1x128xf32, #tpu.memory_space<vmem>>, vector<1x128xf32>
    %32 = vector.broadcast %31 : vector<1x128xf32> to vector<64x128xf32>
    %33 = arith.mulf %30, %32 : vector<64x128xf32>
    %34 = arith.truncf %33 : vector<64x128xf32> to vector<64x128xbf16>
    %c0_20 = arith.constant 0 : index
    %c0_21 = arith.constant 0 : index
    %35 = vector.load %arg10[%c0_20, %c0_21] : memref<64x128xbf16, #tpu.memory_space<vmem>>, vector<64x128xbf16>
    tpu.vector_store %arg10[%c0_20, %c0_21], %34 {strides = array<i32>} : memref<64x128xbf16, #tpu.memory_space<vmem>>, vector<64x128xbf16>,
    return
  }
  func.func @transform_0(%arg0: i32) -> i32 {
    %c0_i32 = arith.constant 0 : i32
    %c0_i32_0 = arith.constant 0 : i32
    return %c0_i32 : i32
  }
  func.func @transform_1(%arg0: i32) -> (i32, i32) {
    %c0_i32 = arith.constant 0 : i32
    %c0_i32_0 = arith.constant 0 : i32
    return %arg0, %c0_i32 : i32, i32
  }
  func.func @transform_2(%arg0: i32) -> (i32, i32) {
    %c0_i32 = arith.constant 0 : i32
    %c0_i32_0 = arith.constant 0 : i32
    %c0_i32_1 = arith.constant 0 : i32
    return %c0_i32, %c0_i32_0 : i32, i32
  }
  func.func @transform_3(%arg0: i32) -> (i32, i32) {
    %c0_i32 = arith.constant 0 : i32
    %c0_i32_0 = arith.constant 0 : i32
    %c0_i32_1 = arith.constant 0 : i32
    return %c0_i32, %c0_i32_0 : i32, i32
  }
  func.func @transform_4(%arg0: i32) -> (i32, i32) {
    %c0_i32 = arith.constant 0 : i32
    %c0_i32_0 = arith.constant 0 : i32
    %c0_i32_1 = arith.constant 0 : i32
    return %c0_i32, %c0_i32_0 : i32, i32
  }
  func.func @transform_5(%arg0: i32) -> (i32, i32) {
    %c0_i32 = arith.constant 0 : i32
    %c0_i32_0 = arith.constant 0 : i32
    %c0_i32_1 = arith.constant 0 : i32
    return %c0_i32, %c0_i32_0 : i32, i32
  }
  func.func @transform_6(%arg0: i32) -> (i32, i32) {
    %c0_i32 = arith.constant 0 : i32
    %c0_i32_0 = arith.constant 0 : i32
    %c0_i32_1 = arith.constant 0 : i32
    return %c0_i32, %c0_i32_0 : i32, i32
  }
  func.func @transform_7(%arg0: i32) -> (i32, i32) {
    %c0_i32 = arith.constant 0 : i32
    %c0_i32_0 = arith.constant 0 : i32
    %c0_i32_1 = arith.constant 0 : i32
    return %c0_i32, %c0_i32_0 : i32, i32
  }
  func.func @transform_8(%arg0: i32) -> (i32, i32) {
    %c0_i32 = arith.constant 0 : i32
    %c0_i32_0 = arith.constant 0 : i32
    %c0_i32_1 = arith.constant 0 : i32
    return %c0_i32, %c0_i32_0 : i32, i32
  }
  func.func @transform_9(%arg0: i32) -> (i32, i32) {
    %c0_i32 = arith.constant 0 : i32
    %c0_i32_0 = arith.constant 0 : i32
    return %arg0, %c0_i32 : i32, i32
  }
}

</mosaic_0001>

<llo_original>
// kernel: actor_forward.1
$region0: #{actor_forward.1}
  #allocation0 [shape = 'u32[]', space=smem, size = 0x4, offset = 0x4, fixed_abs, tag = 'smem constant byte address 0x4 - core index']
  #allocation1 [shape = 'u32[144,128]{1,0:T(1,128)}', space=vmem, size = 0x12000, scoped, tag = 'internal scratch']
  %s0 = inlined_call_operand.vmem [shape: f32[2], index: 0, kind: input, shape index: {}]
  %s1 = inlined_call_operand.vmem [shape: bf16[128,16], index: 1, kind: input, shape index: {}]
  %s2 = inlined_call_operand.vmem [shape: bf16[16,128], index: 2, kind: input, shape index: {}]
  %s3 = inlined_call_operand.vmem [shape: f32[1,128], index: 3, kind: input, shape index: {}]
  %s4 = inlined_call_operand.vmem [shape: bf16[128,128], index: 4, kind: input, shape index: {}]
  %s5 = inlined_call_operand.vmem [shape: f32[1,128], index: 5, kind: input, shape index: {}]
  %s6 = inlined_call_operand.hbm [shape: bf16[128,128], index: 6, kind: input, shape index: {}]
  %s7 = inlined_call_operand.vmem [shape: f32[1,128], index: 7, kind: input, shape index: {}]
  %s8 = inlined_call_operand.vmem [shape: f32[1,128], index: 8, kind: input, shape index: {}]
  %s9 = inlined_call_operand.vmem [shape: bf16[128,128], index: 9, kind: output, shape index: {}]
  %s10 = sld [smem:[#allocation0]]
  $region77: #{actor_forward.1} parent=0
    _
  %s12 = ssub.s32 1, %s10
  %s13 = scalar_select 0, %s12, %s10
  $region1: #{actor_forward.1} parent=0
    #allocation2 [shape = 'u8[512]{0}', space=smem, size = 0x200, scoped, tag = 'input window, operand 0, single buffered']
    #allocation3 [shape = 's32[2]{0}', space=sflag, size = 0x8, scoped, tag = 'scoped memory for actor_forward.1']
    #allocation4 [shape = 's32[2]{0}', space=sflag, size = 0x8, scoped, tag = 'scoped memory for actor_forward.1']
    #allocation5 [shape = 'u8[32768]{0}', space=vmem, size = 0x8000, scoped, tag = 'input window, operand 6, single buffered']
    %14 = vsyncpa [#allocation4], 0
    %15 = vsyncpa [#allocation3], 0
    loop: start=0, step=1, limit=4
    $region2: #{actor_forward.1} parent=1 // loop_pre_header
      _
    $region3: #{actor_forward.1} parent=1 // loop_header
      %s17 = sphi 0, %s21
      %p18 = scmp.ge.s32.totalorder %s17, 4
      %s25 = sphi 0, %s25
      %s27 = sphi 0, %s25
      %s28 = sphi 0, %s27
      %s42 = sphi 0, %s28
      %s48 = sphi 0, %s50
      %s51 = sphi 0, %s48
      %s52 = sphi 0, %s51
      %s68 = sphi 0, %s52
      %s72 = sphi 0, %s72
      %s74 = sphi 0, %s72
      %s75 = sphi 0, %s74
      %s89 = sphi 0, %s75
      %s93 = sphi 0, %s93
      %s95 = sphi 0, %s93
      %s96 = sphi 0, %s95
      %s110 = sphi 0, %s96
      %s114 = sphi 0, %s114
      %s116 = sphi 0, %s114
      %s117 = sphi 0, %s116
      %s131 = sphi 0, %s117
      %s135 = sphi 0, %s135
      %s137 = sphi 0, %s135
      %s138 = sphi 0, %s137
      %s152 = sphi 0, %s138
      %s156 = sphi 0, %s156
      %s158 = sphi 0, %s156
      %s159 = sphi 0, %s158
      %s173 = sphi 0, %s159
      %s177 = sphi 0, %s177
      %s179 = sphi 0, %s177
      %s180 = sphi 0, %s179
      %s194 = sphi 0, %s180
      %s198 = sphi 0, %s198
      %s200 = sphi 0, %s198
      %s201 = sphi 0, %s200
      %s215 = sphi 0, %s201
      %s221 = sphi 0, %s223
      %s224 = sphi 0, %s221
      %s225 = sphi 0, %s224
      %s241 = sphi 0, %s225
    $region4: #{actor_forward.1} parent=1 // loop_header_branch
      %20 = sbr.rel (%p18) target = $region8
    $region5: #{actor_forward.1} parent=1 // loop_body
      %s22 = ssub.s32 %s17, 1
      %s23 = ssub.s32 %s17, 2
      %s24 = sadd.s32 %s17, 1
      %s26 = sadd.s32 %s25, 1
      %p29 = scmp.eq.s32.totalorder %s17, 1
      %p30 = scmp.ne.s32.totalorder %s25, %s27
      %p31 = scmp.eq.s32.totalorder %s17, 0
      %p32 = por %p30, %p31
      %p33 = scmp.ne.s32.totalorder %s25, %s27
      %p34 = scmp.eq.s32.totalorder %s22, 1
      %p35 = por %p33, %p34
      %p36 = scmp.ne.s32.totalorder %s27, %s28
      %p37 = scmp.eq.s32.totalorder %s22, 0
      %p38 = por %p36, %p37
      %p39 = scmp.ne.s32.totalorder %s27, %s28
      %p40 = scmp.eq.s32.totalorder %s23, 1
      %p41 = por %p39, %p40
      %p43 = scmp.ne.s32.totalorder %s28, %s42
      %p44 = scmp.eq.s32.totalorder %s23, 0
      %p45 = por %p43, %p44
      %s46 = ssub.s32 %s17, %s24
      %p47 = scmp.eq.s32.totalorder %s46, 0
      %s49 = sadd.s32 %s48, 1
      %s50 = scalar_select %p47, %s48, %s49
      %p53 = pneg %p47
      %p54 = scmp.eq.s32.totalorder %s17, 1
      %p55 = por %p53, %p54
      %p56 = scmp.ne.s32.totalorder %s48, %s51
      %p57 = scmp.eq.s32.totalorder %s17, 0
      %p58 = por %p56, %p57
      %p59 = scmp.ne.s32.totalorder %s48, %s51
      %p60 = scmp.eq.s32.totalorder %s22, 1
      %p61 = por %p59, %p60
      %p62 = scmp.ne.s32.totalorder %s51, %s52
      %p63 = scmp.eq.s32.totalorder %s22, 0
      %p64 = por %p62, %p63
      %p65 = scmp.ne.s32.totalorder %s51, %s52
      %p66 = scmp.eq.s32.totalorder %s23, 1
      %p67 = por %p65, %p66
      %p69 = scmp.ne.s32.totalorder %s52, %s68
      %p70 = scmp.eq.s32.totalorder %s23, 0
      %p71 = por %p69, %p70
      %s73 = sadd.s32 %s72, 1
      %p76 = scmp.eq.s32.totalorder %s17, 1
      %p77 = scmp.ne.s32.totalorder %s72, %s74
      %p78 = scmp.eq.s32.totalorder %s17, 0
      %p79 = por %p77, %p78
      %p80 = scmp.ne.s32.totalorder %s72, %s74
      %p81 = scmp.eq.s32.totalorder %s22, 1
      %p82 = por %p80, %p81
      %p83 = scmp.ne.s32.totalorder %s74, %s75
      %p84 = scmp.eq.s32.totalorder %s22, 0
      %p85 = por %p83, %p84
      %p86 = scmp.ne.s32.totalorder %s74, %s75
      %p87 = scmp.eq.s32.totalorder %s23, 1
      %p88 = por %p86, %p87
      %p90 = scmp.ne.s32.totalorder %s75, %s89
      %p91 = scmp.eq.s32.totalorder %s23, 0
      %p92 = por %p90, %p91
      %s94 = sadd.s32 %s93, 1
      %p97 = scmp.eq.s32.totalorder %s17, 1
      %p98 = scmp.ne.s32.totalorder %s93, %s95
      %p99 = scmp.eq.s32.totalorder %s17, 0
      %p100 = por %p98, %p99
      %p101 = scmp.ne.s32.totalorder %s93, %s95
      %p102 = scmp.eq.s32.totalorder %s22, 1
      %p103 = por %p101, %p102
      %p104 = scmp.ne.s32.totalorder %s95, %s96
      %p105 = scmp.eq.s32.totalorder %s22, 0
      %p106 = por %p104, %p105
      %p107 = scmp.ne.s32.totalorder %s95, %s96
      %p108 = scmp.eq.s32.totalorder %s23, 1
      %p109 = por %p107, %p108
      %p111 = scmp.ne.s32.totalorder %s96, %s110
      %p112 = scmp.eq.s32.totalorder %s23, 0
      %p113 = por %p111, %p112
      %s115 = sadd.s32 %s114, 1
      %p118 = scmp.eq.s32.totalorder %s17, 1
      %p119 = scmp.ne.s32.totalorder %s114, %s116
      %p120 = scmp.eq.s32.totalorder %s17, 0
      %p121 = por %p119, %p120
      %p122 = scmp.ne.s32.totalorder %s114, %s116
      %p123 = scmp.eq.s32.totalorder %s22, 1
      %p124 = por %p122, %p123
      %p125 = scmp.ne.s32.totalorder %s116, %s117
      %p126 = scmp.eq.s32.totalorder %s22, 0
      %p127 = por %p125, %p126
      %p128 = scmp.ne.s32.totalorder %s116, %s117
      %p129 = scmp.eq.s32.totalorder %s23, 1
      %p130 = por %p128, %p129
      %p132 = scmp.ne.s32.totalorder %s117, %s131
      %p133 = scmp.eq.s32.totalorder %s23, 0
      %p134 = por %p132, %p133
      %s136 = sadd.s32 %s135, 1
      %p139 = scmp.eq.s32.totalorder %s17, 1
      %p140 = scmp.ne.s32.totalorder %s135, %s137
      %p141 = scmp.eq.s32.totalorder %s17, 0
      %p142 = por %p140, %p141
      %p143 = scmp.ne.s32.totalorder %s135, %s137
      %p144 = scmp.eq.s32.totalorder %s22, 1
      %p145 = por %p143, %p144
      %p146 = scmp.ne.s32.totalorder %s137, %s138
      %p147 = scmp.eq.s32.totalorder %s22, 0
      %p148 = por %p146, %p147
      %p149 = scmp.ne.s32.totalorder %s137, %s138
      %p150 = scmp.eq.s32.totalorder %s23, 1
      %p151 = por %p149, %p150
      %p153 = scmp.ne.s32.totalorder %s138, %s152
      %p154 = scmp.eq.s32.totalorder %s23, 0
      %p155 = por %p153, %p154
      %s157 = sadd.s32 %s156, 1
      %p160 = scmp.eq.s32.totalorder %s17, 1
      %p161 = scmp.ne.s32.totalorder %s156, %s158
      %p162 = scmp.eq.s32.totalorder %s17, 0
      %p163 = por %p161, %p162
      %p164 = scmp.ne.s32.totalorder %s156, %s158
      %p165 = scmp.eq.s32.totalorder %s22, 1
      %p166 = por %p164, %p165
      %p167 = scmp.ne.s32.totalorder %s158, %s159
      %p168 = scmp.eq.s32.totalorder %s22, 0
      %p169 = por %p167, %p168
      %p170 = scmp.ne.s32.totalorder %s158, %s159
      %p171 = scmp.eq.s32.totalorder %s23, 1
      %p172 = por %p170, %p171
      %p174 = scmp.ne.s32.totalorder %s159, %s173
      %p175 = scmp.eq.s32.totalorder %s23, 0
      %p176 = por %p174, %p175
      %s178 = sadd.s32 %s177, 1
      %p181 = scmp.eq.s32.totalorder %s17, 1
      %p182 = scmp.ne.s32.totalorder %s177, %s179
      %p183 = scmp.eq.s32.totalorder %s17, 0
      %p184 = por %p182, %p183
      %p185 = scmp.ne.s32.totalorder %s177, %s179
      %p186 = scmp.eq.s32.totalorder %s22, 1
      %p187 = por %p185, %p186
      %p188 = scmp.ne.s32.totalorder %s179, %s180
      %p189 = scmp.eq.s32.totalorder %s22, 0
      %p190 = por %p188, %p189
      %p191 = scmp.ne.s32.totalorder %s179, %s180
      %p192 = scmp.eq.s32.totalorder %s23, 1
      %p193 = por %p191, %p192
      %p195 = scmp.ne.s32.totalorder %s180, %s194
      %p196 = scmp.eq.s32.totalorder %s23, 0
      %p197 = por %p195, %p196
      %s199 = sadd.s32 %s198, 1
      %p202 = scmp.eq.s32.totalorder %s17, 1
      %p203 = scmp.ne.s32.totalorder %s198, %s200
      %p204 = scmp.eq.s32.totalorder %s17, 0
      %p205 = por %p203, %p204
      %p206 = scmp.ne.s32.totalorder %s198, %s200
      %p207 = scmp.eq.s32.totalorder %s22, 1
      %p208 = por %p206, %p207
      %p209 = scmp.ne.s32.totalorder %s200, %s201
      %p210 = scmp.eq.s32.totalorder %s22, 0
      %p211 = por %p209, %p210
      %p212 = scmp.ne.s32.totalorder %s200, %s201
      %p213 = scmp.eq.s32.totalorder %s23, 1
      %p214 = por %p212, %p213
      %p216 = scmp.ne.s32.totalorder %s201, %s215
      %p217 = scmp.eq.s32.totalorder %s23, 0
      %p218 = por %p216, %p217
      %s219 = ssub.s32 %s17, %s24
      %p220 = scmp.eq.s32.totalorder %s219, 0
      %s222 = sadd.s32 %s221, 1
      %s223 = scalar_select %p220, %s221, %s222
      %p226 = pneg %p220
      %p227 = scmp.eq.s32.totalorder %s17, 1
      %p228 = por %p226, %p227
      %p229 = scmp.ne.s32.totalorder %s221, %s224
      %p230 = scmp.eq.s32.totalorder %s17, 0
      %p231 = por %p229, %p230
      %p232 = scmp.ne.s32.totalorder %s221, %s224
      %p233 = scmp.eq.s32.totalorder %s22, 1
      %p234 = por %p232, %p233
      %p235 = scmp.ne.s32.totalorder %s224, %s225
      %p236 = scmp.eq.s32.totalorder %s22, 0
      %p237 = por %p235, %p236
      %p238 = scmp.ne.s32.totalorder %s224, %s225
      %p239 = scmp.eq.s32.totalorder %s23, 1
      %p240 = por %p238, %p239
      %p242 = scmp.ne.s32.totalorder %s225, %s241
      %p243 = scmp.eq.s32.totalorder %s23, 0
      %p244 = por %p242, %p243
      %p245 = scmp.le.s32.totalorder 1, %s17
      %p246 = scmp.lt.s32.totalorder %s17, 3
      %p247 = pnand %p245, %p246
      %p248 = pneg %p247
      // Predicated region
      $region9: #{actor_forward.1} parent=5 // pred_check
        _
      $region10: #{actor_forward.1} parent=5 // pred_check_branch
        %250 = sbr.rel (%p247) target = $region12
      $region11: #{actor_forward.1} parent=5 // pred_region
        %s251 = ssub.s32 %s17, 1
        // Predicated region
        $region13: #{actor_forward.1} parent=11 // pred_check
          %p252 = pneg %p38
        $region14: #{actor_forward.1} parent=11 // pred_check_branch
          %254 = sbr.rel (%p252) target = $region16
        $region15: #{actor_forward.1} parent=11 // pred_region
          %s256 = ssub.s32 16, 16
          %257 = vsyncadd [#allocation4], %s256
          %s259 = sshll.u32 %s0, 4
          %s260 = int_to_ptr.vmem [resolvable:$true] %s259
          %262 = dma.vmem_to_smem %s260, 16, [#allocation2], [#allocation4]
        $region16: #{actor_forward.1} parent=11 // pred_fallthru
          _
        // Predicated region
        $region17: #{actor_forward.1} parent=11 // pred_check
          %p263 = pneg %p85
        $region18: #{actor_forward.1} parent=11 // pred_check_branch
          %265 = sbr.rel (%p263) target = $region20
        $region19: #{actor_forward.1} parent=11 // pred_region
          _
        $region20: #{actor_forward.1} parent=11 // pred_fallthru
          _
        // Predicated region
        $region21: #{actor_forward.1} parent=11 // pred_check
          %p266 = pneg %p106
        $region22: #{actor_forward.1} parent=11 // pred_check_branch
          %268 = sbr.rel (%p266) target = $region24
        $region23: #{actor_forward.1} parent=11 // pred_region
          _
        $region24: #{actor_forward.1} parent=11 // pred_fallthru
          _
        // Predicated region
        $region25: #{actor_forward.1} parent=11 // pred_check
          %p269 = pneg %p127
        $region26: #{actor_forward.1} parent=11 // pred_check_branch
          %271 = sbr.rel (%p269) target = $region28
        $region27: #{actor_forward.1} parent=11 // pred_region
          _
        $region28: #{actor_forward.1} parent=11 // pred_fallthru
          _
        // Predicated region
        $region29: #{actor_forward.1} parent=11 // pred_check
          %p272 = pneg %p148
        $region30: #{actor_forward.1} parent=11 // pred_check_branch
          %274 = sbr.rel (%p272) target = $region32
        $region31: #{actor_forward.1} parent=11 // pred_region
          _
        $region32: #{actor_forward.1} parent=11 // pred_fallthru
          _
        // Predicated region
        $region33: #{actor_forward.1} parent=11 // pred_check
          %p275 = pneg %p169
        $region34: #{actor_forward.1} parent=11 // pred_check_branch
          %277 = sbr.rel (%p275) target = $region36
        $region35: #{actor_forward.1} parent=11 // pred_region
          %s279 = ssub.s32 1024, 1024
          %280 = vsyncadd [#allocation3], %s279
          %s281 = sshll.u32 [#allocation5], 4
          %s282 = int_to_ptr.vmem [resolvable:$true] %s281
          %287 = dma.hbm_to_vmem [thread:$0]  %s6, 1024, %s282, [#allocation3], 64, 64, 4
        $region36: #{actor_forward.1} parent=11 // pred_fallthru
          _
        // Predicated region
        $region37: #{actor_forward.1} parent=11 // pred_check
          %p288 = pneg %p190
        $region38: #{actor_forward.1} parent=11 // pred_check_branch
          %290 = sbr.rel (%p288) target = $region40
        $region39: #{actor_forward.1} parent=11 // pred_region
          _
        $region40: #{actor_forward.1} parent=11 // pred_fallthru
          _
        // Predicated region
        $region41: #{actor_forward.1} parent=11 // pred_check
          %p291 = pneg %p211
        $region42: #{actor_forward.1} parent=11 // pred_check_branch
          %293 = sbr.rel (%p291) target = $region44
        $region43: #{actor_forward.1} parent=11 // pred_region
          _
        $region44: #{actor_forward.1} parent=11 // pred_fallthru
          _
      $region12: #{actor_forward.1} parent=5 // pred_fallthru
        _
      %p294 = scmp.lt.s32.totalorder %s17, 2
      // Predicated region
      $region45: #{actor_forward.1} parent=5 // pred_check
        %p295 = pneg %p294
      $region46: #{actor_forward.1} parent=5 // pred_check_branch
        %297 = sbr.rel (%p295) target = $region48
      $region47: #{actor_forward.1} parent=5 // pred_region
        // Predicated region
        $region49: #{actor_forward.1} parent=47 // pred_check
          %p298 = pneg %p58
        $region50: #{actor_forward.1} parent=47 // pred_check_branch
          %300 = sbr.rel (%p298) target = $region52
        $region51: #{actor_forward.1} parent=47 // pred_region
          %s301 = smul.u32 8, %s17
          %p302 = scmp.lt.s32.totalorder %s301, 15
          %s303 = scalar_select %p302, %s301, 15
          %s304 = smul.addr %s303, 4
          %s305 = scalar_lea.vmem %s1, %s304
          %s306 = smul.u32 8, %s17
        $region52: #{actor_forward.1} parent=47 // pred_fallthru
          _
      $region48: #{actor_forward.1} parent=5 // pred_fallthru
        _
      %p307 = scmp.le.s32.totalorder 1, %s17
      %p308 = scmp.lt.s32.totalorder %s17, 3
      %p309 = pnand %p307, %p308
      %p310 = pneg %p309
      // Predicated region
      $region53: #{actor_forward.1} parent=5 // pred_check
        _
      $region54: #{actor_forward.1} parent=5 // pred_check_branch
        %312 = sbr.rel (%p309) target = $region56
      $region55: #{actor_forward.1} parent=5 // pred_region
        %s313 = ssub.s32 %s17, 1
        // Predicated region
        $region57: #{actor_forward.1} parent=55 // pred_check
          %p314 = pneg %p38
        $region58: #{actor_forward.1} parent=55 // pred_check_branch
          %316 = sbr.rel (%p314) target = $region60
        $region59: #{actor_forward.1} parent=55 // pred_region
          %317 = dma.done [#allocation4], 16
        $region60: #{actor_forward.1} parent=55 // pred_fallthru
          _
        // Predicated region
        $region61: #{actor_forward.1} parent=55 // pred_check
          %p318 = pneg %p169
        $region62: #{actor_forward.1} parent=55 // pred_check_branch
          %320 = sbr.rel (%p318) target = $region64
        $region63: #{actor_forward.1} parent=55 // pred_region
          %321 = dma.done [#allocation3], 1024
        $region64: #{actor_forward.1} parent=55 // pred_fallthru
          _
        %322 = sfence
        %p323 = pneg %p38
        %p324 = pneg %p35
        %s325 = smul.u32 8, %s22
        %p326 = scmp.lt.s32.totalorder %s325, 15
        %s327 = scalar_select %p326, %s325, 15
        %s328 = smul.addr %s327, 4
        %s329 = scalar_lea.vmem %s1, %s328
        %p330 = pneg %p64
        %p331 = pneg %p61
        %p332 = pneg %p85
        %p333 = pneg %p82
        %p334 = pneg %p106
        %p335 = pneg %p103
        %p336 = pneg %p127
        %p337 = pneg %p124
        %p338 = pneg %p148
        %p339 = pneg %p145
        %p340 = pneg %p169
        %p341 = pneg %p166
        %p342 = pneg %p190
        %p343 = pneg %p187
        %p344 = pneg %p211
        %p345 = pneg %p208
        %p346 = pneg %p237
        %p347 = pneg %p234
        %s348 = smul.u32 8, %s22
        %p349 = scmp.lt.s32.totalorder %s348, 15
        %s350 = scalar_select %p349, %s348, 15
        %s351 = smul.addr %s350, 4
        %s352 = scalar_lea.vmem %s9, %s351
        %s353 = smul.u32 8, %s22
        %p354 = scmp.lt.s32.totalorder %s353, 15
        %s355 = scalar_select %p354, %s353, 15
        %s356 = smul.addr %s355, 4
        %s357 = scalar_lea.vmem %s1, %s356
        %s358 = smul.u32 8, %s22
        %s359 = smul.u32 8, %s22
        %p360 = scmp.lt.s32.totalorder %s359, 15
        %s361 = scalar_select %p360, %s359, 15
        %s362 = smul.addr %s361, 4
        %s363 = scalar_lea.vmem %s9, %s362
        %s364 = smul.u32 8, %s22
        %v366 = vld [vmem:[%s357] sm:$0xf]
        %v367 = vld [vmem:[%s357 + $0x4] sm:$0xf]
        %v368 = vld [vmem:[%s357 + $0x8] sm:$0xf]
        %v369 = vld [vmem:[%s357 + $0xc] sm:$0xf]
        %v370 = vld [vmem:[%s357 + $0x10] sm:$0xf]
        %v371 = vld [vmem:[%s357 + $0x14] sm:$0xf]
        %v372 = vld [vmem:[%s357 + $0x18] sm:$0xf]
        %v373 = vld [vmem:[%s357 + $0x1c] sm:$0xf]
        %s374 = sld [smem:[#allocation2]]
        %s375 = sld [smem:[#allocation2 + $0x1]]
        %v376 = vld [vmem:[%s2] sm:$0xf]
        %v377 = vld [vmem:[%s2 + $0x4] sm:$0xf]
        %v378 = vld [vmem:[%s3] sm:$0x1]
        %v380 = vlaneseq
        %v381 = vshrl.u32 %v380, 7
        %v382 = vsub.s32 0, %v381
        %v383 = vrot.slane %v378, %v382
        %v393 = vunpack.c.l.b16 %v366
        %v394 = vunpack.c.l.b16 %v367
        %v395 = vunpack.c.l.b16 %v368
        %v396 = vunpack.c.l.b16 %v369
        %v397 = vunpack.c.l.b16 %v370
        %v398 = vunpack.c.l.b16 %v371
        %v399 = vunpack.c.l.b16 %v372
        %v400 = vunpack.c.l.b16 %v373
        %v401 = vpack.c.b16 %v394, %v393
        %v402 = vpack.c.b16 %v396, %v395
        %v403 = vpack.c.b16 %v398, %v397
        %v404 = vpack.c.b16 %v400, %v399
        %v407 = vunpack.c.l.b16 %v376
        %v408 = vunpack.c.l.b16 %v377
        %v409 = vpack.c.b16 %v408, %v407
        %vm411 = vcmask 130048
        %v413 = vsel %vm411, %v401, 0
        %v416 = vsel %vm411, %v402, 0
        %v419 = vsel %vm411, %v403, 0
        %v422 = vsel %vm411, %v404, 0
        %424 = vmatprep.subr.bf16.mxu0 0
        %425 = vmatpush1.bf16.msra.mxu0 %v409
        %426 = vmatprep.subr.bf16.mxu0 0
        %427 = vmatpush1.bf16.msra.mxu0 0
        %428 = vmatprep.subr.bf16.mxu0 0
        %429 = vmatpush1.bf16.msra.mxu0 0
        %430 = vmatprep.subr.bf16.mxu0 0
        %431 = vmatpush1.bf16.msra.mxu0 0
        %432 = vmatprep.subr.bf16.mxu0 0
        %433 = vmatpush1.bf16.msra.mxu0 0
        %434 = vmatprep.subr.bf16.mxu0 0
        %435 = vmatpush1.bf16.msra.mxu0 0
        %436 = vmatprep.subr.bf16.mxu0 0
        %437 = vmatpush1.bf16.msra.mxu0 0
        %438 = vmatprep.subr.bf16.mxu0 0
        %439 = vmatpush1.bf16.msra.mxu0 0
        %440 = vmatprep.subr.bf16.mxu0 0
        %441 = vmatpush1.bf16.msra.mxu0 0
        %442 = vmatprep.subr.bf16.mxu0 0
        %443 = vmatpush1.bf16.msra.mxu0 0
        %444 = vmatprep.subr.bf16.mxu0 0
        %445 = vmatpush1.bf16.msra.mxu0 0
        %446 = vmatprep.subr.bf16.mxu0 0
        %447 = vmatpush1.bf16.msra.mxu0 0
        %448 = vmatprep.subr.bf16.mxu0 0
        %449 = vmatpush1.bf16.msra.mxu0 0
        %450 = vmatprep.subr.bf16.mxu0 0
        %451 = vmatpush1.bf16.msra.mxu0 0
        %452 = vmatprep.subr.bf16.mxu0 0
        %453 = vmatpush1.bf16.msra.mxu0 0
        %454 = vmatprep.subr.bf16.mxu0 0
        %455 = vmatpush1.bf16.msra.mxu0 0
        %456 = vmatprep.mubr.bf16.mxu0 0
        %457 = vmatmul.mubr.bf16.gmra.mrb[0].mxu0 %v413
        %v458 = vpop.f32.mrb[0].mxu0
        %v459 = vadd.f32 %v383, %v458
        %v460 = vpop.f32.mrb[0].mxu0
        %v461 = vpop.f32.mrb[0].mxu0
        %v462 = vadd.f32 %v383, %v461
        %v463 = vpop.f32.mrb[0].mxu0
        %464 = vmatprep.mubr.bf16.mxu0 0
        %465 = vmatmul.mubr.bf16.gmra.mrb[0].mxu0 %v416
        %v466 = vpop.f32.mrb[0].mxu0
        %v467 = vadd.f32 %v383, %v466
        %v468 = vpop.f32.mrb[0].mxu0
        %v469 = vpop.f32.mrb[0].mxu0
        %v470 = vadd.f32 %v383, %v469
        %v471 = vpop.f32.mrb[0].mxu0
        %472 = vmatprep.mubr.bf16.mxu0 0
        %473 = vmatmul.mubr.bf16.gmra.mrb[0].mxu0 %v419
        %v474 = vpop.f32.mrb[0].mxu0
        %v475 = vadd.f32 %v383, %v474
        %v476 = vpop.f32.mrb[0].mxu0
        %v477 = vpop.f32.mrb[0].mxu0
        %v478 = vadd.f32 %v383, %v477
        %v479 = vpop.f32.mrb[0].mxu0
        %480 = vmatprep.mubr.bf16.mxu0 0
        %481 = vmatmul.mubr.bf16.gmra.mrb[0].mxu0 %v422
        %v482 = vpop.f32.mrb[0].mxu0
        %v483 = vadd.f32 %v383, %v482
        %v484 = vpop.f32.mrb[0].mxu0
        %v485 = vpop.f32.mrb[0].mxu0
        %v486 = vadd.f32 %v383, %v485
        %v487 = vpop.f32.mrb[0].mxu0
        %488 = vdwg.mxu0
        %vm489 = vcmp.gt.f32.partialorder %v459, 0.0
        %vm490 = vcmp.gt.f32.partialorder %v462, 0.0
        %vm491 = vcmp.gt.f32.partialorder %v467, 0.0
        %vm492 = vcmp.gt.f32.partialorder %v470, 0.0
        %vm493 = vcmp.gt.f32.partialorder %v475, 0.0
        %vm494 = vcmp.gt.f32.partialorder %v478, 0.0
        %vm495 = vcmp.gt.f32.partialorder %v483, 0.0
        %vm496 = vcmp.gt.f32.partialorder %v486, 0.0
        %v497 = vstv %s374
        %v498 = vmul.f32 %v497, %v459
        %v499 = vmul.f32 %v497, %v462
        %v500 = vmul.f32 %v497, %v467
        %v501 = vmul.f32 %v497, %v470
        %v502 = vmul.f32 %v497, %v475
        %v503 = vmul.f32 %v497, %v478
        %v504 = vmul.f32 %v497, %v483
        %v505 = vmul.f32 %v497, %v486
        %v506 = vsel %vm489, %v459, %v498
        %v507 = vsel %vm490, %v462, %v499
        %v508 = vsel %vm491, %v467, %v500
        %v509 = vsel %vm492, %v470, %v501
        %v510 = vsel %vm493, %v475, %v502
        %v511 = vsel %vm494, %v478, %v503
        %v512 = vsel %vm495, %v483, %v504
        %v513 = vsel %vm496, %v486, %v505
        %v514 = vpack.c.bf16 %v507, %v506
        %v515 = vpack.c.bf16 %v509, %v508
        %v516 = vpack.c.bf16 %v511, %v510
        %v517 = vpack.c.bf16 %v513, %v512
        %v518 = vld [vmem:[%s4] sm:$0xf]
        %v519 = vld [vmem:[%s4 + $0x4] sm:$0xf]
        %v520 = vld [vmem:[%s4 + $0x8] sm:$0xf]
        %v521 = vld [vmem:[%s4 + $0xc] sm:$0xf]
        %v522 = vld [vmem:[%s4 + $0x10] sm:$0xf]
        %v523 = vld [vmem:[%s4 + $0x14] sm:$0xf]
        %v524 = vld [vmem:[%s4 + $0x18] sm:$0xf]
        %v525 = vld [vmem:[%s4 + $0x1c] sm:$0xf]
        %v526 = vld [vmem:[%s4 + $0x20] sm:$0xf]
        %v527 = vld [vmem:[%s4 + $0x24] sm:$0xf]
        %v528 = vld [vmem:[%s4 + $0x28] sm:$0xf]
        %v529 = vld [vmem:[%s4 + $0x2c] sm:$0xf]
        %v530 = vld [vmem:[%s4 + $0x30] sm:$0xf]
        %v531 = vld [vmem:[%s4 + $0x34] sm:$0xf]
        %v532 = vld [vmem:[%s4 + $0x38] sm:$0xf]
        %v533 = vld [vmem:[%s4 + $0x3c] sm:$0xf]
        %v534 = vld [vmem:[%s5] sm:$0x1]
        %v536 = vlaneseq
        %v537 = vshrl.u32 %v536, 7
        %v538 = vsub.s32 0, %v537
        %v539 = vrot.slane %v534, %v538
        %v557 = vunpack.c.l.b16 %v518
        %v558 = vunpack.c.l.b16 %v519
        %v559 = vunpack.c.l.b16 %v520
        %v560 = vunpack.c.l.b16 %v521
        %v561 = vunpack.c.l.b16 %v522
        %v562 = vunpack.c.l.b16 %v523
        %v563 = vunpack.c.l.b16 %v524
        %v564 = vunpack.c.l.b16 %v525
        %v565 = vunpack.c.l.b16 %v526
        %v566 = vunpack.c.l.b16 %v527
        %v567 = vunpack.c.l.b16 %v528
        %v568 = vunpack.c.l.b16 %v529
        %v569 = vunpack.c.l.b16 %v530
        %v570 = vunpack.c.l.b16 %v531
        %v571 = vunpack.c.l.b16 %v532
        %v572 = vunpack.c.l.b16 %v533
        %v573 = vpack.c.b16 %v558, %v557
        %v574 = vpack.c.b16 %v560, %v559
        %v575 = vpack.c.b16 %v562, %v561
        %v576 = vpack.c.b16 %v564, %v563
        %v577 = vpack.c.b16 %v566, %v565
        %v578 = vpack.c.b16 %v568, %v567
        %v579 = vpack.c.b16 %v570, %v569
        %v580 = vpack.c.b16 %v572, %v571
        %589 = vmatprep.subr.bf16.mxu0 0
        %590 = vmatpush1.bf16.msra.mxu0 %v573
        %591 = vmatprep.subr.bf16.mxu0 0
        %592 = vmatpush1.bf16.msra.mxu0 %v574
        %593 = vmatprep.subr.bf16.mxu0 0
        %594 = vmatpush1.bf16.msra.mxu0 %v575
        %595 = vmatprep.subr.bf16.mxu0 0
        %596 = vmatpush1.bf16.msra.mxu0 %v576
        %597 = vmatprep.subr.bf16.mxu0 0
        %598 = vmatpush1.bf16.msra.mxu0 %v577
        %599 = vmatprep.subr.bf16.mxu0 0
        %600 = vmatpush1.bf16.msra.mxu0 %v578
        %601 = vmatprep.subr.bf16.mxu0 0
        %602 = vmatpush1.bf16.msra.mxu0 %v579
        %603 = vmatprep.subr.bf16.mxu0 0
        %604 = vmatpush1.bf16.msra.mxu0 %v580
        %605 = vmatprep.subr.bf16.mxu0 0
        %606 = vmatpush1.bf16.msra.mxu0 0
        %607 = vmatprep.subr.bf16.mxu0 0
        %608 = vmatpush1.bf16.msra.mxu0 0
        %609 = vmatprep.subr.bf16.mxu0 0
        %610 = vmatpush1.bf16.msra.mxu0 0
        %611 = vmatprep.subr.bf16.mxu0 0
        %612 = vmatpush1.bf16.msra.mxu0 0
        %613 = vmatprep.subr.bf16.mxu0 0
        %614 = vmatpush1.bf16.msra.mxu0 0
        %615 = vmatprep.subr.bf16.mxu0 0
        %616 = vmatpush1.bf16.msra.mxu0 0
        %617 = vmatprep.subr.bf16.mxu0 0
        %618 = vmatpush1.bf16.msra.mxu0 0
        %619 = vmatprep.subr.bf16.mxu0 0
        %620 = vmatpush1.bf16.msra.mxu0 0
        %621 = vmatprep.mubr.bf16.mxu0 0
        %622 = vmatmul.mubr.bf16.gmra.mrb[0].mxu0 %v514
        %v623 = vpop.f32.mrb[0].mxu0
        %v624 = vadd.f32 %v539, %v623
        %v625 = vpop.f32.mrb[0].mxu0
        %v626 = vpop.f32.mrb[0].mxu0
        %v627 = vadd.f32 %v539, %v626
        %v628 = vpop.f32.mrb[0].mxu0
        %629 = vmatprep.mubr.bf16.mxu0 0
        %630 = vmatmul.mubr.bf16.gmra.mrb[0].mxu0 %v515
        %v631 = vpop.f32.mrb[0].mxu0
        %v632 = vadd.f32 %v539, %v631
        %v633 = vpop.f32.mrb[0].mxu0
        %v634 = vpop.f32.mrb[0].mxu0
        %v635 = vadd.f32 %v539, %v634
        %v636 = vpop.f32.mrb[0].mxu0
        %637 = vmatprep.mubr.bf16.mxu0 0
        %638 = vmatmul.mubr.bf16.gmra.mrb[0].mxu0 %v516
        %v639 = vpop.f32.mrb[0].mxu0
        %v640 = vadd.f32 %v539, %v639
        %v641 = vpop.f32.mrb[0].mxu0
        %v642 = vpop.f32.mrb[0].mxu0
        %v643 = vadd.f32 %v539, %v642
        %v644 = vpop.f32.mrb[0].mxu0
        %645 = vmatprep.mubr.bf16.mxu0 0
        %646 = vmatmul.mubr.bf16.gmra.mrb[0].mxu0 %v517
        %v647 = vpop.f32.mrb[0].mxu0
        %v648 = vadd.f32 %v539, %v647
        %v649 = vpop.f32.mrb[0].mxu0
        %v650 = vpop.f32.mrb[0].mxu0
        %v651 = vadd.f32 %v539, %v650
        %v652 = vpop.f32.mrb[0].mxu0
        %653 = vdwg.mxu0
        %vm654 = vcmp.gt.f32.partialorder %v624, 0.0
        %vm655 = vcmp.gt.f32.partialorder %v627, 0.0
        %vm656 = vcmp.gt.f32.partialorder %v632, 0.0
        %vm657 = vcmp.gt.f32.partialorder %v635, 0.0
        %vm658 = vcmp.gt.f32.partialorder %v640, 0.0
        %vm659 = vcmp.gt.f32.partialorder %v643, 0.0
        %vm660 = vcmp.gt.f32.partialorder %v648, 0.0
        %vm661 = vcmp.gt.f32.partialorder %v651, 0.0
        %v662 = vstv %s375
        %v663 = vmul.f32 %v662, %v624
        %v664 = vmul.f32 %v662, %v627
        %v665 = vmul.f32 %v662, %v632
        %v666 = vmul.f32 %v662, %v635
        %v667 = vmul.f32 %v662, %v640
        %v668 = vmul.f32 %v662, %v643
        %v669 = vmul.f32 %v662, %v648
        %v670 = vmul.f32 %v662, %v651
        %v671 = vsel %vm654, %v624, %v663
        %v672 = vsel %vm655, %v627, %v664
        %v673 = vsel %vm656, %v632, %v665
        %v674 = vsel %vm657, %v635, %v666
        %v675 = vsel %vm658, %v640, %v667
        %v676 = vsel %vm659, %v643, %v668
        %v677 = vsel %vm660, %v648, %v669
        %v678 = vsel %vm661, %v651, %v670
        %v679 = vpack.c.bf16 %v672, %v671
        %v680 = vpack.c.bf16 %v674, %v673
        %v681 = vpack.c.bf16 %v676, %v675
        %v682 = vpack.c.bf16 %v678, %v677
        %v683 = vld [vmem:[#allocation5] sm:$0xf]
        %v684 = vld [vmem:[#allocation5 + $0x4] sm:$0xf]
        %v685 = vld [vmem:[#allocation5 + $0x8] sm:$0xf]
        %v686 = vld [vmem:[#allocation5 + $0xc] sm:$0xf]
        %v687 = vld [vmem:[#allocation5 + $0x10] sm:$0xf]
        %v688 = vld [vmem:[#allocation5 + $0x14] sm:$0xf]
        %v689 = vld [vmem:[#allocation5 + $0x18] sm:$0xf]
        %v690 = vld [vmem:[#allocation5 + $0x1c] sm:$0xf]
        %v691 = vld [vmem:[#allocation5 + $0x20] sm:$0xf]
        %v692 = vld [vmem:[#allocation5 + $0x24] sm:$0xf]
        %v693 = vld [vmem:[#allocation5 + $0x28] sm:$0xf]
        %v694 = vld [vmem:[#allocation5 + $0x2c] sm:$0xf]
        %v695 = vld [vmem:[#allocation5 + $0x30] sm:$0xf]
        %v696 = vld [vmem:[#allocation5 + $0x34] sm:$0xf]
        %v697 = vld [vmem:[#allocation5 + $0x38] sm:$0xf]
        %v698 = vld [vmem:[#allocation5 + $0x3c] sm:$0xf]
        %v699 = vld [vmem:[%s7] sm:$0x1]
        %v701 = vlaneseq
        %v702 = vshrl.u32 %v701, 7
        %v703 = vsub.s32 0, %v702
        %v704 = vrot.slane %v699, %v703
        %v722 = vunpack.c.l.b16 %v683
        %v723 = vunpack.c.l.b16 %v684
        %v724 = vunpack.c.l.b16 %v685
        %v725 = vunpack.c.l.b16 %v686
        %v726 = vunpack.c.l.b16 %v687
        %v727 = vunpack.c.l.b16 %v688
        %v728 = vunpack.c.l.b16 %v689
        %v729 = vunpack.c.l.b16 %v690
        %v730 = vunpack.c.l.b16 %v691
        %v731 = vunpack.c.l.b16 %v692
        %v732 = vunpack.c.l.b16 %v693
        %v733 = vunpack.c.l.b16 %v694
        %v734 = vunpack.c.l.b16 %v695
        %v735 = vunpack.c.l.b16 %v696
        %v736 = vunpack.c.l.b16 %v697
        %v737 = vunpack.c.l.b16 %v698
        %v738 = vpack.c.b16 %v723, %v722
        %v739 = vpack.c.b16 %v725, %v724
        %v740 = vpack.c.b16 %v727, %v726
        %v741 = vpack.c.b16 %v729, %v728
        %v742 = vpack.c.b16 %v731, %v730
        %v743 = vpack.c.b16 %v733, %v732
        %v744 = vpack.c.b16 %v735, %v734
        %v745 = vpack.c.b16 %v737, %v736
        %754 = vmatprep.subr.bf16.mxu0 0
        %755 = vmatpush1.bf16.msra.mxu0 %v738
        %756 = vmatprep.subr.bf16.mxu0 0
        %757 = vmatpush1.bf16.msra.mxu0 %v739
        %758 = vmatprep.subr.bf16.mxu0 0
        %759 = vmatpush1.bf16.msra.mxu0 %v740
        %760 = vmatprep.subr.bf16.mxu0 0
        %761 = vmatpush1.bf16.msra.mxu0 %v741
        %762 = vmatprep.subr.bf16.mxu0 0
        %763 = vmatpush1.bf16.msra.mxu0 %v742
        %764 = vmatprep.subr.bf16.mxu0 0
        %765 = vmatpush1.bf16.msra.mxu0 %v743
        %766 = vmatprep.subr.bf16.mxu0 0
        %767 = vmatpush1.bf16.msra.mxu0 %v744
        %768 = vmatprep.subr.bf16.mxu0 0
        %769 = vmatpush1.bf16.msra.mxu0 %v745
        %770 = vmatprep.subr.bf16.mxu0 0
        %771 = vmatpush1.bf16.msra.mxu0 0
        %772 = vmatprep.subr.bf16.mxu0 0
        %773 = vmatpush1.bf16.msra.mxu0 0
        %774 = vmatprep.subr.bf16.mxu0 0
        %775 = vmatpush1.bf16.msra.mxu0 0
        %776 = vmatprep.subr.bf16.mxu0 0
        %777 = vmatpush1.bf16.msra.mxu0 0
        %778 = vmatprep.subr.bf16.mxu0 0
        %779 = vmatpush1.bf16.msra.mxu0 0
        %780 = vmatprep.subr.bf16.mxu0 0
        %781 = vmatpush1.bf16.msra.mxu0 0
        %782 = vmatprep.subr.bf16.mxu0 0
        %783 = vmatpush1.bf16.msra.mxu0 0
        %784 = vmatprep.subr.bf16.mxu0 0
        %785 = vmatpush1.bf16.msra.mxu0 0
        %786 = vmatprep.mubr.bf16.mxu0 0
        %787 = vmatmul.mubr.bf16.gmra.mrb[0].mxu0 %v679
        %v788 = vpop.f32.mrb[0].mxu0
        %v789 = vadd.f32 %v704, %v788
        %v790 = vpop.f32.mrb[0].mxu0
        %v791 = vpop.f32.mrb[0].mxu0
        %v792 = vadd.f32 %v704, %v791
        %v793 = vpop.f32.mrb[0].mxu0
        %794 = vmatprep.mubr.bf16.mxu0 0
        %795 = vmatmul.mubr.bf16.gmra.mrb[0].mxu0 %v680
        %v796 = vpop.f32.mrb[0].mxu0
        %v797 = vadd.f32 %v704, %v796
        %v798 = vpop.f32.mrb[0].mxu0
        %v799 = vpop.f32.mrb[0].mxu0
        %v800 = vadd.f32 %v704, %v799
        %v801 = vpop.f32.mrb[0].mxu0
        %802 = vmatprep.mubr.bf16.mxu0 0
        %803 = vmatmul.mubr.bf16.gmra.mrb[0].mxu0 %v681
        %v804 = vpop.f32.mrb[0].mxu0
        %v805 = vadd.f32 %v704, %v804
        %v806 = vpop.f32.mrb[0].mxu0
        %v807 = vpop.f32.mrb[0].mxu0
        %v808 = vadd.f32 %v704, %v807
        %v809 = vpop.f32.mrb[0].mxu0
        %810 = vmatprep.mubr.bf16.mxu0 0
        %811 = vmatmul.mubr.bf16.gmra.mrb[0].mxu0 %v682
        %v812 = vpop.f32.mrb[0].mxu0
        %v813 = vadd.f32 %v704, %v812
        %v814 = vpop.f32.mrb[0].mxu0
        %v815 = vpop.f32.mrb[0].mxu0
        %v816 = vadd.f32 %v704, %v815
        %v817 = vpop.f32.mrb[0].mxu0
        %818 = vdwg.mxu0
        %v819 = vtanh.pop %v789
        %v820 = vtanh.pop %v792
        %v821 = vtanh.pop %v797
        %v822 = vtanh.pop %v800
        %v823 = vtanh.pop %v805
        %v824 = vtanh.pop %v808
        %v825 = vtanh.pop %v813
        %v826 = vtanh.pop %v816
        %v827 = vld [vmem:[%s8] sm:$0x1]
        %v829 = vlaneseq
        %v830 = vshrl.u32 %v829, 7
        %v831 = vsub.s32 0, %v830
        %v832 = vrot.slane %v827, %v831
        %v834 = vmul.f32 %v819, %v832
        %v835 = vmul.f32 %v820, %v832
        %v836 = vmul.f32 %v821, %v832
        %v837 = vmul.f32 %v822, %v832
        %v838 = vmul.f32 %v823, %v832
        %v839 = vmul.f32 %v824, %v832
        %v840 = vmul.f32 %v825, %v832
        %v841 = vmul.f32 %v826, %v832
        %v842 = vpack.c.bf16 %v835, %v834
        %v843 = vpack.c.bf16 %v837, %v836
        %v844 = vpack.c.bf16 %v839, %v838
        %v845 = vpack.c.bf16 %v841, %v840
        %v850 = vunpack.c.l.b16 %v842
        %v851 = vunpack.c.h.b16 %v842
        %v852 = vunpack.c.l.b16 %v843
        %v853 = vunpack.c.h.b16 %v843
        %v854 = vunpack.c.l.b16 %v844
        %v855 = vunpack.c.h.b16 %v844
        %v856 = vunpack.c.l.b16 %v845
        %v857 = vunpack.c.h.b16 %v845
        %v858 = vpack.c.b16 %v850, %v850
        %v859 = vpack.c.b16 %v851, %v851
        %v860 = vpack.c.b16 %v852, %v852
        %v861 = vpack.c.b16 %v853, %v853
        %v862 = vpack.c.b16 %v854, %v854
        %v863 = vpack.c.b16 %v855, %v855
        %v864 = vpack.c.b16 %v856, %v856
        %v865 = vpack.c.b16 %v857, %v857
        %874 = vst [vmem:[%s363] sm:$0xf] %v858
        %875 = vst [vmem:[%s363 + $0x4] sm:$0xf] %v859
        %876 = vst [vmem:[%s363 + $0x8] sm:$0xf] %v860
        %877 = vst [vmem:[%s363 + $0xc] sm:$0xf] %v861
        %878 = vst [vmem:[%s363 + $0x10] sm:$0xf] %v862
        %879 = vst [vmem:[%s363 + $0x14] sm:$0xf] %v863
        %880 = vst [vmem:[%s363 + $0x18] sm:$0xf] %v864
        %881 = vst [vmem:[%s363 + $0x1c] sm:$0xf] %v865
        %s882 = smul.u32 8, %s22
        %p883 = scmp.lt.s32.totalorder %s882, 15
        %s884 = scalar_select %p883, %s882, 15
        %s885 = smul.addr %s884, 4
        %s886 = scalar_lea.vmem %s9, %s885
        // Predicated region
        $region65: #{actor_forward.1} parent=55 // pred_check
          %p887 = pneg %p234
        $region66: #{actor_forward.1} parent=55 // pred_check_branch
          %889 = sbr.rel (%p887) target = $region68
        $region67: #{actor_forward.1} parent=55 // pred_region
          %s890 = smul.u32 8, %s22
        $region68: #{actor_forward.1} parent=55 // pred_fallthru
          _
      $region56: #{actor_forward.1} parent=5 // pred_fallthru
        _
      %p891 = scmp.le.s32.totalorder 2, %s17
      // Predicated region
      $region69: #{actor_forward.1} parent=5 // pred_check
        %p892 = pneg %p891
      $region70: #{actor_forward.1} parent=5 // pred_check_branch
        %894 = sbr.rel (%p892) target = $region72
      $region71: #{actor_forward.1} parent=5 // pred_region
        %s895 = ssub.s32 %s17, 2
        // Predicated region
        $region73: #{actor_forward.1} parent=71 // pred_check
          %p896 = pneg %p240
        $region74: #{actor_forward.1} parent=71 // pred_check_branch
          %898 = sbr.rel (%p896) target = $region76
        $region75: #{actor_forward.1} parent=71 // pred_region
          %s899 = smul.u32 8, %s23
          %p900 = scmp.lt.s32.totalorder %s899, 15
          %s901 = scalar_select %p900, %s899, 15
          %s902 = smul.addr %s901, 4
          %s903 = scalar_lea.vmem %s9, %s902
        $region76: #{actor_forward.1} parent=71 // pred_fallthru
          _
      $region72: #{actor_forward.1} parent=5 // pred_fallthru
        _
    $region6: #{actor_forward.1} parent=1 // loop_footer
      %s21 = sadd.s32 1, %s17
    $region7: #{actor_forward.1} parent=1 // loop_footer_branch
      %16 = sbr.rel target = $region3
    $region8: #{actor_forward.1} parent=1 // loop_exit
      _
    %904 = vsyncpa [#allocation3], 1
    %s905 = scalar_lea.sflag [#allocation3], 1
    %906 = vsyncpa %s905, 1
    %907 = vsyncpa [#allocation4], 1
    %s908 = scalar_lea.sflag [#allocation4], 1
    %909 = vsyncpa %s908, 1

</llo_original>
